<compile_context>
chip_gen: v7x
topology: tpu7x:2x2x1
jax: 0.10.0
libtpu: 0.0.40
codegen_flags: <defaults>
</compile_context>

<pallas_src>
import functools

import jax
import jax.numpy as jnp
from jax.experimental import pallas as pl
from jax.experimental.pallas import tpu as pltpu


# ----------------------------------------------------------------------------
# helpers
# ----------------------------------------------------------------------------
def _round_up(x, m):
    return ((x + m - 1) // m) * m


def _pick_tiles(n):
    """Pick (n_pad, tm, tk) such that tm and tk both divide n_pad, with
    limited padding overhead (prefers large tiles when they fit cleanly)."""
    n128 = _round_up(max(n, 1), 128)
    for tm, tk in ((256, 512), (256, 256), (128, 128)):
        n_pad = _round_up(n128, tk)
        # accept <= 12.5% padding overhead, otherwise try a finer grain.
        if (n_pad - n128) * 8 <= n128 or (tm, tk) == (128, 128):
            return n_pad, tm, tk
    return n128, 128, 128  # unreachable


def _gcn_dense_adj(src, dst, num_nodes, out_size=None):
    """Dense normalized adjacency A[i, j] = d_i^{-1/2} d_j^{-1/2} for edge j->i.

    Matches PyG gcn_norm(add_self_loops=False, improved=False, edge_weight=1).
    """
    out_size = num_nodes if out_size is None else out_size
    ones = jnp.ones(src.shape[0], jnp.float32)
    deg = jnp.zeros((num_nodes,), jnp.float32).at[dst].add(ones)
    dinv = jnp.where(deg > 0, jax.lax.rsqrt(jnp.maximum(deg, 1e-30)), 0.0)
    norm = dinv[src] * dinv[dst]
    adj = jnp.zeros((out_size, out_size), jnp.float32).at[dst, src].add(norm)
    return adj


# ----------------------------------------------------------------------------
# Pallas kernels
# ----------------------------------------------------------------------------
def _fused_agg_kernel(a_in_ref, a_out_ref, xs_ref, xd_ref, w_ref, wl_ref, b_ref,
                      o_ref, acc_ref, *, agg_dtype):
    """acc += A_in_tile @ (Xs @ W_in') + A_out_tile @ (Xs @ W_out');
    epilogue adds Xd @ W_lin + combined bias."""
    k = pl.program_id(1)

    @pl.when(k == 0)
    def _():
        acc_ref[...] = jnp.zeros_like(acc_ref)

    c = o_ref.shape[-1]
    # Recompute the projected source features for this reduction block
    # (cheap: C_in << tm, saves streaming two N x C_pad arrays from HBM).
    h = jnp.dot(xs_ref[...], w_ref[...], preferred_element_type=jnp.float32)
    h_in = h[:, :c].astype(agg_dtype)
    h_out = h[:, c:].astype(agg_dtype)

    acc_ref[...] += (
        jnp.dot(a_in_ref[...], h_in, preferred_element_type=jnp.float32)
        + jnp.dot(a_out_ref[...], h_out, preferred_element_type=jnp.float32))

    @pl.when(k == pl.num_programs(1) - 1)
    def _():
        lin = jnp.dot(xd_ref[...], wl_ref[...], preferred_element_type=jnp.float32)
        o_ref[...] = (acc_ref[...] + lin + b_ref[...]).astype(o_ref.dtype)


def _project_kernel(x_ref, w_ref, b_ref, h_in_ref, h_out_ref, lin_ref):
    """H_all = X @ [W_in' | W_out' | W_lin]; split, add combined bias to lin."""
    c = lin_ref.shape[-1]
    h_all = jnp.dot(x_ref[...], w_ref[...], preferred_element_type=jnp.float32)
    h_in_ref[...] = h_all[:, :c].astype(h_in_ref.dtype)
    h_out_ref[...] = h_all[:, c:2 * c].astype(h_out_ref.dtype)
    lin_ref[...] = (h_all[:, 2 * c:] + b_ref[...]).astype(lin_ref.dtype)


def _aggregate_kernel(a_in_ref, a_out_ref, h_in_ref, h_out_ref, lin_ref,
                      o_ref, acc_ref):
    """acc += A_in_tile @ H_in_blk + A_out_tile @ H_out_blk; epilogue adds lin."""
    k = pl.program_id(1)

    @pl.when(k == 0)
    def _():
        acc_ref[...] = jnp.zeros_like(acc_ref)

    acc_ref[...] += (
        jnp.dot(a_in_ref[...], h_in_ref[...], preferred_element_type=jnp.float32)
        + jnp.dot(a_out_ref[...], h_out_ref[...], preferred_element_type=jnp.float32))

    @pl.when(k == pl.num_programs(1) - 1)
    def _():
        o_ref[...] = (acc_ref[...] + lin_ref[...]).astype(o_ref.dtype)


# ----------------------------------------------------------------------------
# wrapper
# ----------------------------------------------------------------------------
def dirgnn_conv(x, edge_index, params, alpha, *,
                agg_dtype=jnp.bfloat16, fuse_projection=None):
    """DirGNNConv(GCNConv(in, out), alpha) forward.

    x:          [N, C_in] float32 node features
    edge_index: [2, E] int32   (row 0 = source, row 1 = target)
    params:     dict with w_in/b_in, w_out/b_out, w_lin/b_lin
                (weights stored as [C_in, C_out], biases as [1, C_out])
    agg_dtype:  storage dtype of the streamed adjacencies / projections
                (bf16 halves the dominant N^2 HBM stream; accumulation is f32).
    """
    n, c_in = x.shape
    c_out = params["w_in"].shape[1]
    alpha = float(alpha)

    c_pad = _round_up(c_out, 128)          # lane-dense output
    n_pad, tm, tk = _pick_tiles(n)

    if fuse_projection is None:
        # Recompute overhead of the fused path is ~C_in/tm of the agg flops;
        # its HBM saving requires C_in < C_pad.  Fuse only when clearly cheap.
        fuse_projection = c_in <= min(tm // 2, c_pad)

    # ---- XLA glue: normalized adjacencies + folded / padded parameters -------
    src, dst = edge_index[0], edge_index[1]
    a_in = _gcn_dense_adj(src, dst, n, n_pad).astype(agg_dtype)    # original dir
    a_out = _gcn_dense_adj(dst, src, n, n_pad).astype(agg_dtype)   # flipped dir

    x_pad = jnp.zeros((n_pad, c_in), jnp.float32).at[:n, :].set(
        x.astype(jnp.float32))

    def _pad_w(w):
        return jnp.zeros((c_in, c_pad), jnp.float32).at[:, :c_out].set(
            w.astype(jnp.float32))

    # alpha folded into the projection weights; all biases folded into one.
    w_in = _pad_w(params["w_in"]) * (1.0 - alpha)
    w_out = _pad_w(params["w_out"]) * alpha
    w_lin = _pad_w(params["w_lin"])
    b_comb = ((1.0 - alpha) * params["b_in"] + alpha * params["b_out"]
              + params["b_lin"]).astype(jnp.float32)
    b_comb = jnp.zeros((1, c_pad), jnp.float32).at[:, :c_out].set(b_comb)

    adj_bytes = jnp.dtype(agg_dtype).itemsize
    out_bytes = jnp.dtype(x.dtype).itemsize

    if fuse_projection:
        # ---- single fused kernel: project-on-the-fly + aggregate -------------
        w_cat = jnp.concatenate([w_in, w_out], axis=1)             # [C_in, 2*c_pad]
        cost = pl.CostEstimate(
            flops=(2 * 2 * n_pad * n_pad * c_pad
                   + (n_pad // tm) * 2 * n_pad * c_in * 3 * c_pad),
            transcendentals=0,
            bytes_accessed=(2 * n_pad * n_pad * adj_bytes
                            + (n_pad // tm) * n_pad * c_in * 4
                            + n_pad * c_pad * out_bytes))
        vmem_need = (2 * 2 * tm * tk * adj_bytes      # two adjacency tiles, dbl-buf
                     + 2 * tk * c_in * 4              # x source block
                     + 2 * tm * c_in * 4              # x dst block
                     + 2 * c_in * 3 * c_pad * 4       # weights (resident, tiny)
                     + 2 * tm * c_pad * out_bytes     # output, double-buffered
                     + tm * c_pad * 4 + 2 * c_pad * 4)
        vmem_limit = int(min(max(2 * vmem_need, 16 << 20), 48 << 20))

        out_pad = pl.pallas_call(
            functools.partial(_fused_agg_kernel, agg_dtype=agg_dtype),
            out_shape=jax.ShapeDtypeStruct((n_pad, c_pad), x.dtype),
            grid=(n_pad // tm, n_pad // tk),
            in_specs=[pl.BlockSpec((tm, tk), lambda i, k: (i, k)),
                      pl.BlockSpec((tm, tk), lambda i, k: (i, k)),
                      pl.BlockSpec((tk, c_in), lambda i, k: (k, 0)),
                      pl.BlockSpec((tm, c_in), lambda i, k: (i, 0)),
                      pl.BlockSpec((c_in, 2 * c_pad), lambda i, k: (0, 0)),
                      pl.BlockSpec((c_in, c_pad), lambda i, k: (0, 0)),
                      pl.BlockSpec((1, c_pad), lambda i, k: (0, 0))],
            out_specs=pl.BlockSpec((tm, c_pad), lambda i, k: (i, 0)),
            scratch_shapes=[pltpu.VMEM((tm, c_pad), jnp.float32)],
            compiler_params=pltpu.CompilerParams(
                dimension_semantics=("parallel", "arbitrary"),
                vmem_limit_bytes=vmem_limit),
            cost_estimate=cost,
        )(a_in, a_out, x_pad, x_pad, w_cat, w_lin, b_comb)
        return out_pad[:n, :c_out]

    # ---- fallback: kernel 1 (projection) + kernel 2 (aggregation) ------------
    w_all = jnp.concatenate([w_in, w_out, w_lin], axis=1)          # [C_in, 3*c_pad]
    proj_cost = pl.CostEstimate(
        flops=2 * n_pad * c_in * 3 * c_pad,
        transcendentals=0,
        bytes_accessed=(n_pad * c_in * 4 + c_in * 3 * c_pad * 4
                        + 2 * n_pad * c_pad * adj_bytes + n_pad * c_pad * 4))
    h_in, h_out, lin = pl.pallas_call(
        _project_kernel,
        out_shape=(jax.ShapeDtypeStruct((n_pad, c_pad), agg_dtype),
                   jax.ShapeDtypeStruct((n_pad, c_pad), agg_dtype),
                   jax.ShapeDtypeStruct((n_pad, c_pad), jnp.float32)),
        grid=(n_pad // tm,),
        in_specs=[pl.BlockSpec((tm, c_in), lambda i: (i, 0)),
                  pl.BlockSpec((c_in, 3 * c_pad), lambda i: (0, 0)),
                  pl.BlockSpec((1, c_pad), lambda i: (0, 0))],
        out_specs=(pl.BlockSpec((tm, c_pad), lambda i: (i, 0)),
                   pl.BlockSpec((tm, c_pad), lambda i: (i, 0)),
                   pl.BlockSpec((tm, c_pad), lambda i: (i, 0))),
        compiler_params=pltpu.CompilerParams(dimension_semantics=("parallel",)),
        cost_estimate=proj_cost,
    )(x_pad, w_all, b_comb)

    agg_cost = pl.CostEstimate(
        flops=2 * 2 * n_pad * n_pad * c_pad,
        transcendentals=0,
        bytes_accessed=(2 * n_pad * n_pad * adj_bytes
                        + (n_pad // tm) * 2 * n_pad * c_pad * adj_bytes
                        + n_pad * c_pad * 4 + n_pad * c_pad * out_bytes))
    vmem_need = (2 * 2 * tm * tk * adj_bytes
                 + 2 * 2 * tk * c_pad * adj_bytes
                 + 2 * tm * c_pad * 4
                 + 2 * tm * c_pad * out_bytes
                 + tm * c_pad * 4)
    vmem_limit = int(min(max(2 * vmem_need, 16 << 20), 48 << 20))

    out_pad = pl.pallas_call(
        _aggregate_kernel,
        out_shape=jax.ShapeDtypeStruct((n_pad, c_pad), x.dtype),
        grid=(n_pad // tm, n_pad // tk),
        in_specs=[pl.BlockSpec((tm, tk), lambda i, k: (i, k)),
                  pl.BlockSpec((tm, tk), lambda i, k: (i, k)),
                  pl.BlockSpec((tk, c_pad), lambda i, k: (k, 0)),
                  pl.BlockSpec((tk, c_pad), lambda i, k: (k, 0)),
                  pl.BlockSpec((tm, c_pad), lambda i, k: (i, 0))],
        out_specs=pl.BlockSpec((tm, c_pad), lambda i, k: (i, 0)),
        scratch_shapes=[pltpu.VMEM((tm, c_pad), jnp.float32)],
        compiler_params=pltpu.CompilerParams(
            dimension_semantics=("parallel", "arbitrary"),
            vmem_limit_bytes=vmem_limit),
        cost_estimate=agg_cost,
    )(a_in, a_out, h_in, h_out, lin)

    return out_pad[:n, :c_out]


# ----------------------------------------------------------------------------
# pure-JAX reference
# ----------------------------------------------------------------------------
def _reference(x, edge_index, params, alpha):
    n = x.shape[0]
    src, dst = edge_index[0], edge_index[1]
    a_in = _gcn_dense_adj(src, dst, n)
    a_out = _gcn_dense_adj(dst, src, n)
    x_in = a_in @ (x @ params["w_in"]) + params["b_in"]
    x_out = a_out @ (x @ params["w_out"]) + params["b_out"]
    lin = x @ params["w_lin"] + params["b_lin"]
    return alpha * x_out + (1.0 - alpha) * x_in + lin


if __name__ == "__main__":
    # Small, deterministic problem consistent with the module's forward(x, edge_index).
    N, C_IN, C_OUT, E = 16, 8, 32, 40
    ALPHA = 0.5

    key = jax.random.PRNGKey(0)
    k_x, k_es, k_ed, k_wi, k_wo, k_wl, k_bi, k_bo, k_bl = jax.random.split(key, 9)

    x = jax.random.normal(k_x, (N, C_IN), jnp.float32)
    edge_index = jnp.stack([
        jax.random.randint(k_es, (E,), 0, N, jnp.int32),
        jax.random.randint(k_ed, (E,), 0, N, jnp.int32),
    ], axis=0)

    scale = 1.0 / jnp.sqrt(jnp.float32(C_IN))
    params = {
        "w_in":  jax.random.normal(k_wi, (C_IN, C_OUT), jnp.float32) * scale,
        "b_in":  jax.random.normal(k_bi, (1, C_OUT), jnp.float32) * 0.1,
        "w_out": jax.random.normal(k_wo, (C_IN, C_OUT), jnp.float32) * scale,
        "b_out": jax.random.normal(k_bo, (1, C_OUT), jnp.float32) * 0.1,
        "w_lin": jax.random.normal(k_wl, (C_IN, C_OUT), jnp.float32) * scale,
        "b_lin": jax.random.normal(k_bl, (1, C_OUT), jnp.float32) * 0.1,
    }

    ref = _reference(x, edge_index, params, ALPHA)

    # Fused path, f32 aggregation: tight semantic check.
    out_f32 = jax.block_until_ready(
        dirgnn_conv(x, edge_index, params, ALPHA, agg_dtype=jnp.float32))
    assert out_f32.shape == (N, C_OUT)
    assert jnp.allclose(out_f32, ref, atol=1e-4, rtol=1e-4), \
        "Pallas fused f32 output mismatch vs reference"

    # Fused path, bf16 streaming (default perf config; f32 accumulation).
    out_bf16 = jax.block_until_ready(dirgnn_conv(x, edge_index, params, ALPHA))
    assert out_bf16.shape == (N, C_OUT)
    assert jnp.allclose(out_bf16, ref, atol=5e-2, rtol=5e-2), \
        "Pallas fused bf16 output mismatch vs reference"

    # Unfused fallback path (used when C_in is large), bf16 streaming.
    out_unfused = jax.block_until_ready(
        dirgnn_conv(x, edge_index, params, ALPHA, fuse_projection=False))
    assert out_unfused.shape == (N, C_OUT)
    assert jnp.allclose(out_unfused, ref, atol=5e-2, rtol=5e-2), \
        "Pallas unfused bf16 output mismatch vs reference"

    print("KERNEL_OK")
</pallas_src>

<mosaic_0001>
module attributes {stable_mosaic.version = 11 : i64} {
  func.func @_fused_agg_kernel(%arg0: i32, %arg1: i32, %arg2: memref<128x128xf32, #tpu.memory_space<vmem>>, %arg3: memref<128x128xf32, #tpu.memory_space<vmem>>, %arg4: memref<128x8xf32, #tpu.memory_space<vmem>>, %arg5: memref<128x8xf32, #tpu.memory_space<vmem>>, %arg6: memref<8x256xf32, #tpu.memory_space<vmem>>, %arg7: memref<8x128xf32, #tpu.memory_space<vmem>>, %arg8: memref<1x128xf32, #tpu.memory_space<vmem>>, %arg9: memref<128x128xf32, #tpu.memory_space<vmem>>, %arg10: memref<128x128xf32, #tpu.memory_space<vmem>>) attributes {dimension_semantics = [#tpu.dimension_semantics<parallel>, #tpu.dimension_semantics<arbitrary>], iteration_bounds = array<i64: 1, 1>, scalar_prefetch = 0 : i64, scratch_operands = 1 : i64, tpu.core_type = #tpu.core_type<tc>, window_params = [{transform_indices = @transform_0, window_bounds = array<i64: 128, 128>}, {transform_indices = @transform_1, window_bounds = array<i64: 128, 128>}, {transform_indices = @transform_2, window_bounds = array<i64: 128, 8>}, {transform_indices = @transform_3, window_bounds = array<i64: 128, 8>}, {pipeline_mode = #tpu.pipeline_mode<synchronous>, transform_indices = @transform_4, window_bounds = array<i64: 8, 256>}, {pipeline_mode = #tpu.pipeline_mode<synchronous>, transform_indices = @transform_5, window_bounds = array<i64: 8, 128>}, {pipeline_mode = #tpu.pipeline_mode<synchronous>, transform_indices = @transform_6, window_bounds = array<i64: 1, 128>}, {transform_indices = @transform_7, window_bounds = array<i64: 128, 128>}]} {
    %c0_i32 = arith.constant 0 : i32
    %0 = arith.cmpi eq, %arg1, %c0_i32 : i32
    %1 = arith.extui %0 : i1 to i32
    %c0_i32_0 = arith.constant 0 : i32
    %2 = arith.cmpi ne, %1, %c0_i32_0 : i32
    scf.if %2 {
      %cst_16 = arith.constant 0.000000e+00 : f32
      %19 = vector.broadcast %cst_16 : f32 to vector<128x128xf32>
      %c0_17 = arith.constant 0 : index
      %c0_18 = arith.constant 0 : index
      %20 = vector.load %arg10[%c0_17, %c0_18] : memref<128x128xf32, #tpu.memory_space<vmem>>, vector<128x128xf32>
      tpu.vector_store %arg10[%c0_17, %c0_18], %19 {strides = array<i32>} : memref<128x128xf32, #tpu.memory_space<vmem>>, vector<128x128xf32>,
    } else {
    }
    %c0 = arith.constant 0 : index
    %c0_1 = arith.constant 0 : index
    %3 = vector.load %arg4[%c0, %c0_1] : memref<128x8xf32, #tpu.memory_space<vmem>>, vector<128x8xf32>
    %c0_2 = arith.constant 0 : index
    %c0_3 = arith.constant 0 : index
    %4 = vector.load %arg6[%c0_2, %c0_3] : memref<8x256xf32, #tpu.memory_space<vmem>>, vector<8x256xf32>
    %cst = arith.constant dense<0.000000e+00> : vector<128x256xf32>
    %5 = tpu.matmul %3, %4, %cst {dimension_numbers = #tpu.dot_dimension_numbers<[1], [0], [0], [1], [0, 0, 1, 1], [], []>} : vector<128x8xf32>, vector<8x256xf32>, vector<128x256xf32> -> vector<128x256xf32>
    %6 = vector.extract_strided_slice %5 {offsets = [0, 0], sizes = [128, 128], strides = [1, 1]} : vector<128x256xf32> to vector<128x128xf32>
    %7 = vector.extract_strided_slice %5 {offsets = [0, 128], sizes = [128, 128], strides = [1, 1]} : vector<128x256xf32> to vector<128x128xf32>
    %c0_4 = arith.constant 0 : index
    %c0_5 = arith.constant 0 : index
    %8 = vector.load %arg10[%c0_4, %c0_5] : memref<128x128xf32, #tpu.memory_space<vmem>>, vector<128x128xf32>
    %c0_6 = arith.constant 0 : index
    %c0_7 = arith.constant 0 : index
    %9 = vector.load %arg2[%c0_6, %c0_7] : memref<128x128xf32, #tpu.memory_space<vmem>>, vector<128x128xf32>
    %cst_8 = arith.constant dense<0.000000e+00> : vector<128x128xf32>
    %10 = tpu.matmul %9, %6, %cst_8 {dimension_numbers = #tpu.dot_dimension_numbers<[1], [0], [0], [1], [0, 0, 1, 1], [], []>} : vector<128x128xf32>, vector<128x128xf32>, vector<128x128xf32> -> vector<128x128xf32>
    %c0_9 = arith.constant 0 : index
    %c0_10 = arith.constant 0 : index
    %11 = vector.load %arg3[%c0_9, %c0_10] : memref<128x128xf32, #tpu.memory_space<vmem>>, vector<128x128xf32>
    %cst_11 = arith.constant dense<0.000000e+00> : vector<128x128xf32>
    %12 = tpu.matmul %11, %7, %cst_11 {dimension_numbers = #tpu.dot_dimension_numbers<[1], [0], [0], [1], [0, 0, 1, 1], [], []>} : vector<128x128xf32>, vector<128x128xf32>, vector<128x128xf32> -> vector<128x128xf32>
    %13 = arith.addf %10, %12 : vector<128x128xf32>
    %14 = arith.addf %8, %13 : vector<128x128xf32>
    %c0_12 = arith.constant 0 : index
    %c0_13 = arith.constant 0 : index
    %15 = vector.load %arg10[%c0_12, %c0_13] : memref<128x128xf32, #tpu.memory_space<vmem>>, vector<128x128xf32>
    tpu.vector_store %arg10[%c0_12, %c0_13], %14 {strides = array<i32>} : memref<128x128xf32, #tpu.memory_space<vmem>>, vector<128x128xf32>,
    %c0_i32_14 = arith.constant 0 : i32
    %16 = arith.cmpi eq, %arg1, %c0_i32_14 : i32
    %17 = arith.extui %16 : i1 to i32
    %c0_i32_15 = arith.constant 0 : i32
    %18 = arith.cmpi ne, %17, %c0_i32_15 : i32
    scf.if %18 {
      %c0_16 = arith.constant 0 : index
      %c0_17 = arith.constant 0 : index
      %19 = vector.load %arg5[%c0_16, %c0_17] : memref<128x8xf32, #tpu.memory_space<vmem>>, vector<128x8xf32>
      %c0_18 = arith.constant 0 : index
      %c0_19 = arith.constant 0 : index
      %20 = vector.load %arg7[%c0_18, %c0_19] : memref<8x128xf32, #tpu.memory_space<vmem>>, vector<8x128xf32>
      %cst_20 = arith.constant dense<0.000000e+00> : vector<128x128xf32>
      %21 = tpu.matmul %19, %20, %cst_20 {dimension_numbers = #tpu.dot_dimension_numbers<[1], [0], [0], [1], [0, 0, 1, 1], [], []>} : vector<128x8xf32>, vector<8x128xf32>, vector<128x128xf32> -> vector<128x128xf32>
      %c0_21 = arith.constant 0 : index
      %c0_22 = arith.constant 0 : index
      %22 = vector.load %arg10[%c0_21, %c0_22] : memref<128x128xf32, #tpu.memory_space<vmem>>, vector<128x128xf32>
      %23 = arith.addf %22, %21 : vector<128x128xf32>
      %c0_23 = arith.constant 0 : index
      %c0_24 = arith.constant 0 : index
      %24 = vector.load %arg8[%c0_23, %c0_24] : memref<1x128xf32, #tpu.memory_space<vmem>>, vector<1x128xf32>
      %25 = vector.broadcast %24 : vector<1x128xf32> to vector<128x128xf32>
      %26 = arith.addf %23, %25 : vector<128x128xf32>
      %c0_25 = arith.constant 0 : index
      %c0_26 = arith.constant 0 : index
      %27 = vector.load %arg9[%c0_25, %c0_26] : memref<128x128xf32, #tpu.memory_space<vmem>>, vector<128x128xf32>
      tpu.vector_store %arg9[%c0_25, %c0_26], %26 {strides = array<i32>} : memref<128x128xf32, #tpu.memory_space<vmem>>, vector<128x128xf32>,
    } else {
    }
    return
  }
  func.func @transform_0(%arg0: i32, %arg1: i32) -> (i32, i32) {
    %c0_i32 = arith.constant 0 : i32
    return %arg0, %arg1 : i32, i32
  }
  func.func @transform_1(%arg0: i32, %arg1: i32) -> (i32, i32) {
    %c0_i32 = arith.constant 0 : i32
    return %arg0, %arg1 : i32, i32
  }
  func.func @transform_2(%arg0: i32, %arg1: i32) -> (i32, i32) {
    %c0_i32 = arith.constant 0 : i32
    %c0_i32_0 = arith.constant 0 : i32
    return %arg1, %c0_i32 : i32, i32
  }
  func.func @transform_3(%arg0: i32, %arg1: i32) -> (i32, i32) {
    %c0_i32 = arith.constant 0 : i32
    %c0_i32_0 = arith.constant 0 : i32
    return %arg0, %c0_i32 : i32, i32
  }
  func.func @transform_4(%arg0: i32, %arg1: i32) -> (i32, i32) {
    %c0_i32 = arith.constant 0 : i32
    %c0_i32_0 = arith.constant 0 : i32
    %c0_i32_1 = arith.constant 0 : i32
    return %c0_i32, %c0_i32_0 : i32, i32
  }
  func.func @transform_5(%arg0: i32, %arg1: i32) -> (i32, i32) {
    %c0_i32 = arith.constant 0 : i32
    %c0_i32_0 = arith.constant 0 : i32
    %c0_i32_1 = arith.constant 0 : i32
    return %c0_i32, %c0_i32_0 : i32, i32
  }
  func.func @transform_6(%arg0: i32, %arg1: i32) -> (i32, i32) {
    %c0_i32 = arith.constant 0 : i32
    %c0_i32_0 = arith.constant 0 : i32
    %c0_i32_1 = arith.constant 0 : i32
    return %c0_i32, %c0_i32_0 : i32, i32
  }
  func.func @transform_7(%arg0: i32, %arg1: i32) -> (i32, i32) {
    %c0_i32 = arith.constant 0 : i32
    %c0_i32_0 = arith.constant 0 : i32
    return %arg0, %c0_i32 : i32, i32
  }
}

</mosaic_0001>

<llo_original>
// kernel: tpu_custom_call.1
$region0: #{tpu_custom_call.1}
  #allocation0 [shape = 'u32[]', space=smem, size = 0x4, offset = 0x4, fixed_abs, tag = 'smem constant byte address 0x4 - core index']
  #allocation1 [shape = 'u32[144,128]{1,0:T(1,128)}', space=vmem, size = 0x12000, scoped, tag = 'internal scratch']
  #allocation2 [shape = 'f32[128,128]{1,0:T(8,128)}', space=vmem, size = 0x10000, scoped, tag = 'scratch operand']
  %s0 = inlined_call_operand.vmem [shape: f32[128,128], index: 0, kind: input, shape index: {}]
  %s1 = inlined_call_operand.vmem [shape: f32[128,128], index: 1, kind: input, shape index: {}]
  %s2 = inlined_call_operand.vmem [shape: f32[128,8], index: 2, kind: input, shape index: {}]
  %s3 = inlined_call_operand.vmem [shape: f32[128,8], index: 3, kind: input, shape index: {}]
  %s4 = inlined_call_operand.vmem [shape: f32[8,256], index: 4, kind: input, shape index: {}]
  %s5 = inlined_call_operand.vmem [shape: f32[8,128], index: 5, kind: input, shape index: {}]
  %s6 = inlined_call_operand.vmem [shape: f32[1,128], index: 6, kind: input, shape index: {}]
  %s7 = inlined_call_operand.hbm [shape: f32[128,128], index: 7, kind: output, shape index: {}]
  %s8 = sld [smem:[#allocation0]]
  $region46: #{tpu_custom_call.1} parent=0
    _
  %s10 = ssub.s32 1, %s8
  %s11 = scalar_select 0, %s10, %s8
  $region1: #{tpu_custom_call.1} parent=0
    #allocation3 [shape = 'u8[65536]{0}', space=vmem, size = 0x10000, scoped, tag = 'output window, operand 0, single buffered']
    #allocation4 [shape = 's32[1]{0}', space=sflag, size = 0x4, scoped, tag = 'scoped memory for tpu_custom_call.1']
    %12 = vsyncpa [#allocation4], 0
    // Predicated region
    $region2: #{tpu_custom_call.1} parent=1 // pred_check
      _
    $region3: #{tpu_custom_call.1} parent=1 // pred_check_branch
      %14 = sbr.rel (0) target = $region5
    $region4: #{tpu_custom_call.1} parent=1 // pred_region
      _
    $region5: #{tpu_custom_call.1} parent=1 // pred_fallthru
      _
    // Predicated region
    $region6: #{tpu_custom_call.1} parent=1 // pred_check
      _
    $region7: #{tpu_custom_call.1} parent=1 // pred_check_branch
      %16 = sbr.rel (0) target = $region9
    $region8: #{tpu_custom_call.1} parent=1 // pred_region
      _
    $region9: #{tpu_custom_call.1} parent=1 // pred_fallthru
      _
    // Predicated region
    $region10: #{tpu_custom_call.1} parent=1 // pred_check
      _
    $region11: #{tpu_custom_call.1} parent=1 // pred_check_branch
      %18 = sbr.rel (0) target = $region13
    $region12: #{tpu_custom_call.1} parent=1 // pred_region
      _
    $region13: #{tpu_custom_call.1} parent=1 // pred_fallthru
      _
    // Predicated region
    $region14: #{tpu_custom_call.1} parent=1 // pred_check
      _
    $region15: #{tpu_custom_call.1} parent=1 // pred_check_branch
      %20 = sbr.rel (0) target = $region17
    $region16: #{tpu_custom_call.1} parent=1 // pred_region
      _
    $region17: #{tpu_custom_call.1} parent=1 // pred_fallthru
      _
    // Predicated region
    $region18: #{tpu_custom_call.1} parent=1 // pred_check
      _
    $region19: #{tpu_custom_call.1} parent=1 // pred_check_branch
      %22 = sbr.rel (0) target = $region21
    $region20: #{tpu_custom_call.1} parent=1 // pred_region
      _
    $region21: #{tpu_custom_call.1} parent=1 // pred_fallthru
      _
    // Predicated region
    $region22: #{tpu_custom_call.1} parent=1 // pred_check
      _
    $region23: #{tpu_custom_call.1} parent=1 // pred_check_branch
      %24 = sbr.rel (0) target = $region25
    $region24: #{tpu_custom_call.1} parent=1 // pred_region
      _
    $region25: #{tpu_custom_call.1} parent=1 // pred_fallthru
      _
    // Predicated region
    $region26: #{tpu_custom_call.1} parent=1 // pred_check
      _
    $region27: #{tpu_custom_call.1} parent=1 // pred_check_branch
      %26 = sbr.rel (0) target = $region29
    $region28: #{tpu_custom_call.1} parent=1 // pred_region
      _
    $region29: #{tpu_custom_call.1} parent=1 // pred_fallthru
      _
    %p27 = scmp.eq.s32.totalorder 0, 0
    // Predicated region
    $region30: #{tpu_custom_call.1} parent=1 // pred_check
      %p28 = pneg %p27
    $region31: #{tpu_custom_call.1} parent=1 // pred_check_branch
      %30 = sbr.rel (%p28) target = $region33
    $region32: #{tpu_custom_call.1} parent=1 // pred_region
      %31 = vst [vmem:[#allocation2] sm:$0xff] 0.0
      %32 = vst [vmem:[#allocation2 + $0x8] sm:$0xff] 0.0
      %33 = vst [vmem:[#allocation2 + $0x10] sm:$0xff] 0.0
      %34 = vst [vmem:[#allocation2 + $0x18] sm:$0xff] 0.0
      %35 = vst [vmem:[#allocation2 + $0x20] sm:$0xff] 0.0
      %36 = vst [vmem:[#allocation2 + $0x28] sm:$0xff] 0.0
      %37 = vst [vmem:[#allocation2 + $0x30] sm:$0xff] 0.0
      %38 = vst [vmem:[#allocation2 + $0x38] sm:$0xff] 0.0
      %39 = vst [vmem:[#allocation2 + $0x40] sm:$0xff] 0.0
      %40 = vst [vmem:[#allocation2 + $0x48] sm:$0xff] 0.0
      %41 = vst [vmem:[#allocation2 + $0x50] sm:$0xff] 0.0
      %42 = vst [vmem:[#allocation2 + $0x58] sm:$0xff] 0.0
      %43 = vst [vmem:[#allocation2 + $0x60] sm:$0xff] 0.0
      %44 = vst [vmem:[#allocation2 + $0x68] sm:$0xff] 0.0
      %45 = vst [vmem:[#allocation2 + $0x70] sm:$0xff] 0.0
      %46 = vst [vmem:[#allocation2 + $0x78] sm:$0xff] 0.0
    $region33: #{tpu_custom_call.1} parent=1 // pred_fallthru
      _
    %v47 = vld [vmem:[%s2] sm:$0xff]
    %v48 = vld [vmem:[%s2 + $0x8] sm:$0xff]
    %v49 = vld [vmem:[%s2 + $0x10] sm:$0xff]
    %v50 = vld [vmem:[%s2 + $0x18] sm:$0xff]
    %v51 = vld [vmem:[%s2 + $0x20] sm:$0xff]
    %v52 = vld [vmem:[%s2 + $0x28] sm:$0xff]
    %v53 = vld [vmem:[%s2 + $0x30] sm:$0xff]
    %v54 = vld [vmem:[%s2 + $0x38] sm:$0xff]
    %v55 = vld [vmem:[%s2 + $0x40] sm:$0xff]
    %v56 = vld [vmem:[%s2 + $0x48] sm:$0xff]
    %v57 = vld [vmem:[%s2 + $0x50] sm:$0xff]
    %v58 = vld [vmem:[%s2 + $0x58] sm:$0xff]
    %v59 = vld [vmem:[%s2 + $0x60] sm:$0xff]
    %v60 = vld [vmem:[%s2 + $0x68] sm:$0xff]
    %v61 = vld [vmem:[%s2 + $0x70] sm:$0xff]
    %v62 = vld [vmem:[%s2 + $0x78] sm:$0xff]
    %v63 = vld [vmem:[%s4] sm:$0xff]
    %v64 = vld [vmem:[%s4 + $0x8] sm:$0xff]
    %vm65 = vcmask 64512
    %v67 = vsel %vm65, %v47, 0
    %v70 = vsel %vm65, %v48, 0
    %v73 = vsel %vm65, %v49, 0
    %v76 = vsel %vm65, %v50, 0
    %v79 = vsel %vm65, %v51, 0
    %v82 = vsel %vm65, %v52, 0
    %v85 = vsel %vm65, %v53, 0
    %v88 = vsel %vm65, %v54, 0
    %v91 = vsel %vm65, %v55, 0
    %v94 = vsel %vm65, %v56, 0
    %v97 = vsel %vm65, %v57, 0
    %v100 = vsel %vm65, %v58, 0
    %v103 = vsel %vm65, %v59, 0
    %v106 = vsel %vm65, %v60, 0
    %v109 = vsel %vm65, %v61, 0
    %v112 = vsel %vm65, %v62, 0
    %114 = vmatprep.subr.mxu0 %v64
    %115 = vmatpush1.msra.mxu0 %v63
    %116 = vmatprep.subr.mxu0 0.0
    %117 = vmatpush1.msra.mxu0 0.0
    %118 = vmatprep.subr.mxu0 0.0
    %119 = vmatpush1.msra.mxu0 0.0
    %120 = vmatprep.subr.mxu0 0.0
    %121 = vmatpush1.msra.mxu0 0.0
    %122 = vmatprep.subr.mxu0 0.0
    %123 = vmatpush1.msra.mxu0 0.0
    %124 = vmatprep.subr.mxu0 0.0
    %125 = vmatpush1.msra.mxu0 0.0
    %126 = vmatprep.subr.mxu0 0.0
    %127 = vmatpush1.msra.mxu0 0.0
    %128 = vmatprep.subr.mxu0 0.0
    %129 = vmatpush1.msra.mxu0 0.0
    %130 = vmatprep.subr.mxu0 0.0
    %131 = vmatpush1.msra.mxu0 0.0
    %132 = vmatprep.subr.mxu0 0.0
    %133 = vmatpush1.msra.mxu0 0.0
    %134 = vmatprep.subr.mxu0 0.0
    %135 = vmatpush1.msra.mxu0 0.0
    %136 = vmatprep.subr.mxu0 0.0
    %137 = vmatpush1.msra.mxu0 0.0
    %138 = vmatprep.subr.mxu0 0.0
    %139 = vmatpush1.msra.mxu0 0.0
    %140 = vmatprep.subr.mxu0 0.0
    %141 = vmatpush1.msra.mxu0 0.0
    %142 = vmatprep.subr.mxu0 0.0
    %143 = vmatpush1.msra.mxu0 0.0
    %144 = vmatprep.subr.mxu0 0.0
    %145 = vmatpush1.msra.mxu0 0.0
    %146 = vmatprep.subr.mxu0 0.0
    %147 = vmatpush1.msra.mxu0 0.0
    %148 = vmatprep.subr.mxu0 0.0
    %149 = vmatpush1.msra.mxu0 0.0
    %150 = vmatprep.subr.mxu0 0.0
    %151 = vmatpush1.msra.mxu0 0.0
    %152 = vmatprep.subr.mxu0 0.0
    %153 = vmatpush1.msra.mxu0 0.0
    %154 = vmatprep.subr.mxu0 0.0
    %155 = vmatpush1.msra.mxu0 0.0
    %156 = vmatprep.subr.mxu0 0.0
    %157 = vmatpush1.msra.mxu0 0.0
    %158 = vmatprep.subr.mxu0 0.0
    %159 = vmatpush1.msra.mxu0 0.0
    %160 = vmatprep.subr.mxu0 0.0
    %161 = vmatpush1.msra.mxu0 0.0
    %162 = vmatprep.subr.mxu0 0.0
    %163 = vmatpush1.msra.mxu0 0.0
    %164 = vmatprep.subr.mxu0 0.0
    %165 = vmatpush1.msra.mxu0 0.0
    %166 = vmatprep.subr.mxu0 0.0
    %167 = vmatpush1.msra.mxu0 0.0
    %168 = vmatprep.subr.mxu0 0.0
    %169 = vmatpush1.msra.mxu0 0.0
    %170 = vmatprep.subr.mxu0 0.0
    %171 = vmatpush1.msra.mxu0 0.0
    %172 = vmatprep.subr.mxu0 0.0
    %173 = vmatpush1.msra.mxu0 0.0
    %174 = vmatprep.subr.mxu0 0.0
    %175 = vmatpush1.msra.mxu0 0.0
    %176 = vmatprep.subr.mxu0 0.0
    %177 = vmatpush1.msra.mxu0 0.0
    %178 = vmatprep.mubr.f32.mxu0 0.0
    %179 = vmatmul.mubr.f32.gmra.mrb[0].mxu0 %v67
    %v180 = vpop.f32.mrb[0].mxu0
    %v181 = vadd.f32 0.0, %v180
    %v182 = vpop.f32.mrb[0].mxu0
    %v183 = vadd.f32 0.0, %v182
    %184 = vmatprep.mubr.f32.mxu0 0.0
    %185 = vmatmul.mubr.f32.gmra.mrb[0].mxu0 %v70
    %v186 = vpop.f32.mrb[0].mxu0
    %v187 = vadd.f32 0.0, %v186
    %v188 = vpop.f32.mrb[0].mxu0
    %v189 = vadd.f32 0.0, %v188
    %190 = vmatprep.mubr.f32.mxu0 0.0
    %191 = vmatmul.mubr.f32.gmra.mrb[0].mxu0 %v73
    %v192 = vpop.f32.mrb[0].mxu0
    %v193 = vadd.f32 0.0, %v192
    %v194 = vpop.f32.mrb[0].mxu0
    %v195 = vadd.f32 0.0, %v194
    %196 = vmatprep.mubr.f32.mxu0 0.0
    %197 = vmatmul.mubr.f32.gmra.mrb[0].mxu0 %v76
    %v198 = vpop.f32.mrb[0].mxu0
    %v199 = vadd.f32 0.0, %v198
    %v200 = vpop.f32.mrb[0].mxu0
    %v201 = vadd.f32 0.0, %v200
    %202 = vmatprep.mubr.f32.mxu0 0.0
    %203 = vmatmul.mubr.f32.gmra.mrb[0].mxu0 %v79
    %v204 = vpop.f32.mrb[0].mxu0
    %v205 = vadd.f32 0.0, %v204
    %v206 = vpop.f32.mrb[0].mxu0
    %v207 = vadd.f32 0.0, %v206
    %208 = vmatprep.mubr.f32.mxu0 0.0
    %209 = vmatmul.mubr.f32.gmra.mrb[0].mxu0 %v82
    %v210 = vpop.f32.mrb[0].mxu0
    %v211 = vadd.f32 0.0, %v210
    %v212 = vpop.f32.mrb[0].mxu0
    %v213 = vadd.f32 0.0, %v212
    %214 = vmatprep.mubr.f32.mxu0 0.0
    %215 = vmatmul.mubr.f32.gmra.mrb[0].mxu0 %v85
    %v216 = vpop.f32.mrb[0].mxu0
    %v217 = vadd.f32 0.0, %v216
    %v218 = vpop.f32.mrb[0].mxu0
    %v219 = vadd.f32 0.0, %v218
    %220 = vmatprep.mubr.f32.mxu0 0.0
    %221 = vmatmul.mubr.f32.gmra.mrb[0].mxu0 %v88
    %v222 = vpop.f32.mrb[0].mxu0
    %v223 = vadd.f32 0.0, %v222
    %v224 = vpop.f32.mrb[0].mxu0
    %v225 = vadd.f32 0.0, %v224
    %226 = vmatprep.mubr.f32.mxu0 0.0
    %227 = vmatmul.mubr.f32.gmra.mrb[0].mxu0 %v91
    %v228 = vpop.f32.mrb[0].mxu0
    %v229 = vadd.f32 0.0, %v228
    %v230 = vpop.f32.mrb[0].mxu0
    %v231 = vadd.f32 0.0, %v230
    %232 = vmatprep.mubr.f32.mxu0 0.0
    %233 = vmatmul.mubr.f32.gmra.mrb[0].mxu0 %v94
    %v234 = vpop.f32.mrb[0].mxu0
    %v235 = vadd.f32 0.0, %v234
    %v236 = vpop.f32.mrb[0].mxu0
    %v237 = vadd.f32 0.0, %v236
    %238 = vmatprep.mubr.f32.mxu0 0.0
    %239 = vmatmul.mubr.f32.gmra.mrb[0].mxu0 %v97
    %v240 = vpop.f32.mrb[0].mxu0
    %v241 = vadd.f32 0.0, %v240
    %v242 = vpop.f32.mrb[0].mxu0
    %v243 = vadd.f32 0.0, %v242
    %244 = vmatprep.mubr.f32.mxu0 0.0
    %245 = vmatmul.mubr.f32.gmra.mrb[0].mxu0 %v100
    %v246 = vpop.f32.mrb[0].mxu0
    %v247 = vadd.f32 0.0, %v246
    %v248 = vpop.f32.mrb[0].mxu0
    %v249 = vadd.f32 0.0, %v248
    %250 = vmatprep.mubr.f32.mxu0 0.0
    %251 = vmatmul.mubr.f32.gmra.mrb[0].mxu0 %v103
    %v252 = vpop.f32.mrb[0].mxu0
    %v253 = vadd.f32 0.0, %v252
    %v254 = vpop.f32.mrb[0].mxu0
    %v255 = vadd.f32 0.0, %v254
    %256 = vmatprep.mubr.f32.mxu0 0.0
    %257 = vmatmul.mubr.f32.gmra.mrb[0].mxu0 %v106
    %v258 = vpop.f32.mrb[0].mxu0
    %v259 = vadd.f32 0.0, %v258
    %v260 = vpop.f32.mrb[0].mxu0
    %v261 = vadd.f32 0.0, %v260
    %262 = vmatprep.mubr.f32.mxu0 0.0
    %263 = vmatmul.mubr.f32.gmra.mrb[0].mxu0 %v109
    %v264 = vpop.f32.mrb[0].mxu0
    %v265 = vadd.f32 0.0, %v264
    %v266 = vpop.f32.mrb[0].mxu0
    %v267 = vadd.f32 0.0, %v266
    %268 = vmatprep.mubr.f32.mxu0 0.0
    %269 = vmatmul.mubr.f32.gmra.mrb[0].mxu0 %v112
    %v270 = vpop.f32.mrb[0].mxu0
    %v271 = vadd.f32 0.0, %v270
    %v272 = vpop.f32.mrb[0].mxu0
    %v273 = vadd.f32 0.0, %v272
    %274 = vdwg.mxu0
    %v275 = vld [vmem:[#allocation2] sm:$0xff]
    %v276 = vld [vmem:[#allocation2 + $0x8] sm:$0xff]
    %v277 = vld [vmem:[#allocation2 + $0x10] sm:$0xff]
    %v278 = vld [vmem:[#allocation2 + $0x18] sm:$0xff]
    %v279 = vld [vmem:[#allocation2 + $0x20] sm:$0xff]
    %v280 = vld [vmem:[#allocation2 + $0x28] sm:$0xff]
    %v281 = vld [vmem:[#allocation2 + $0x30] sm:$0xff]
    %v282 = vld [vmem:[#allocation2 + $0x38] sm:$0xff]
    %v283 = vld [vmem:[#allocation2 + $0x40] sm:$0xff]
    %v284 = vld [vmem:[#allocation2 + $0x48] sm:$0xff]
    %v285 = vld [vmem:[#allocation2 + $0x50] sm:$0xff]
    %v286 = vld [vmem:[#allocation2 + $0x58] sm:$0xff]
    %v287 = vld [vmem:[#allocation2 + $0x60] sm:$0xff]
    %v288 = vld [vmem:[#allocation2 + $0x68] sm:$0xff]
    %v289 = vld [vmem:[#allocation2 + $0x70] sm:$0xff]
    %v290 = vld [vmem:[#allocation2 + $0x78] sm:$0xff]
    %v291 = vld [vmem:[%s0] sm:$0xff]
    %v292 = vld [vmem:[%s0 + $0x8] sm:$0xff]
    %v293 = vld [vmem:[%s0 + $0x10] sm:$0xff]
    %v294 = vld [vmem:[%s0 + $0x18] sm:$0xff]
    %v295 = vld [vmem:[%s0 + $0x20] sm:$0xff]
    %v296 = vld [vmem:[%s0 + $0x28] sm:$0xff]
    %v297 = vld [vmem:[%s0 + $0x30] sm:$0xff]
    %v298 = vld [vmem:[%s0 + $0x38] sm:$0xff]
    %v299 = vld [vmem:[%s0 + $0x40] sm:$0xff]
    %v300 = vld [vmem:[%s0 + $0x48] sm:$0xff]
    %v301 = vld [vmem:[%s0 + $0x50] sm:$0xff]
    %v302 = vld [vmem:[%s0 + $0x58] sm:$0xff]
    %v303 = vld [vmem:[%s0 + $0x60] sm:$0xff]
    %v304 = vld [vmem:[%s0 + $0x68] sm:$0xff]
    %v305 = vld [vmem:[%s0 + $0x70] sm:$0xff]
    %v306 = vld [vmem:[%s0 + $0x78] sm:$0xff]
    %v307 = vld [vmem:[%s1] sm:$0xff]
    %v308 = vld [vmem:[%s1 + $0x8] sm:$0xff]
    %v309 = vld [vmem:[%s1 + $0x10] sm:$0xff]
    %v310 = vld [vmem:[%s1 + $0x18] sm:$0xff]
    %v311 = vld [vmem:[%s1 + $0x20] sm:$0xff]
    %v312 = vld [vmem:[%s1 + $0x28] sm:$0xff]
    %v313 = vld [vmem:[%s1 + $0x30] sm:$0xff]
    %v314 = vld [vmem:[%s1 + $0x38] sm:$0xff]
    %v315 = vld [vmem:[%s1 + $0x40] sm:$0xff]
    %v316 = vld [vmem:[%s1 + $0x48] sm:$0xff]
    %v317 = vld [vmem:[%s1 + $0x50] sm:$0xff]
    %v318 = vld [vmem:[%s1 + $0x58] sm:$0xff]
    %v319 = vld [vmem:[%s1 + $0x60] sm:$0xff]
    %v320 = vld [vmem:[%s1 + $0x68] sm:$0xff]
    %v321 = vld [vmem:[%s1 + $0x70] sm:$0xff]
    %v322 = vld [vmem:[%s1 + $0x78] sm:$0xff]
    %323 = vmatprep.subr.mxu0 0.0
    %324 = vmatpush1.msra.mxu0 %v183
    %325 = vmatprep.subr.mxu0 0.0
    %326 = vmatpush1.msra.mxu0 %v189
    %327 = vmatprep.subr.mxu0 0.0
    %328 = vmatpush1.msra.mxu0 %v195
    %329 = vmatprep.subr.mxu0 0.0
    %330 = vmatpush1.msra.mxu0 %v201
    %331 = vmatprep.subr.mxu0 0.0
    %332 = vmatpush1.msra.mxu0 %v207
    %333 = vmatprep.subr.mxu0 0.0
    %334 = vmatpush1.msra.mxu0 %v213
    %335 = vmatprep.subr.mxu0 0.0
    %336 = vmatpush1.msra.mxu0 %v219
    %337 = vmatprep.subr.mxu0 0.0
    %338 = vmatpush1.msra.mxu0 %v225
    %339 = vmatprep.subr.mxu0 0.0
    %340 = vmatpush1.msra.mxu0 %v231
    %341 = vmatprep.subr.mxu0 0.0
    %342 = vmatpush1.msra.mxu0 %v237
    %343 = vmatprep.subr.mxu0 0.0
    %344 = vmatpush1.msra.mxu0 %v243
    %345 = vmatprep.subr.mxu0 0.0
    %346 = vmatpush1.msra.mxu0 %v249
    %347 = vmatprep.subr.mxu0 0.0
    %348 = vmatpush1.msra.mxu0 %v255
    %349 = vmatprep.subr.mxu0 0.0
    %350 = vmatpush1.msra.mxu0 %v261
    %351 = vmatprep.subr.mxu0 0.0
    %352 = vmatpush1.msra.mxu0 %v267
    %353 = vmatprep.subr.mxu0 0.0
    %354 = vmatpush1.msra.mxu0 %v273
    %355 = vmatprep.subr.mxu0 0.0
    %356 = vmatpush1.msra.mxu0 0.0
    %357 = vmatprep.subr.mxu0 0.0
    %358 = vmatpush1.msra.mxu0 0.0
    %359 = vmatprep.subr.mxu0 0.0
    %360 = vmatpush1.msra.mxu0 0.0
    %361 = vmatprep.subr.mxu0 0.0
    %362 = vmatpush1.msra.mxu0 0.0
    %363 = vmatprep.subr.mxu0 0.0
    %364 = vmatpush1.msra.mxu0 0.0
    %365 = vmatprep.subr.mxu0 0.0
    %366 = vmatpush1.msra.mxu0 0.0
    %367 = vmatprep.subr.mxu0 0.0
    %368 = vmatpush1.msra.mxu0 0.0
    %369 = vmatprep.subr.mxu0 0.0
    %370 = vmatpush1.msra.mxu0 0.0
    %371 = vmatprep.subr.mxu0 0.0
    %372 = vmatpush1.msra.mxu0 0.0
    %373 = vmatprep.subr.mxu0 0.0
    %374 = vmatpush1.msra.mxu0 0.0
    %375 = vmatprep.subr.mxu0 0.0
    %376 = vmatpush1.msra.mxu0 0.0
    %377 = vmatprep.subr.mxu0 0.0
    %378 = vmatpush1.msra.mxu0 0.0
    %379 = vmatprep.subr.mxu0 0.0
    %380 = vmatpush1.msra.mxu0 0.0
    %381 = vmatprep.subr.mxu0 0.0
    %382 = vmatpush1.msra.mxu0 0.0
    %383 = vmatprep.subr.mxu0 0.0
    %384 = vmatpush1.msra.mxu0 0.0
    %385 = vmatprep.subr.mxu0 0.0
    %386 = vmatpush1.msra.mxu0 0.0
    %387 = vmatprep.mubr.f32.mxu0 0.0
    %388 = vmatmul.mubr.f32.gmra.mrb[0].mxu0 %v307
    %v389 = vpop.f32.mrb[0].mxu0
    %v390 = vadd.f32 0.0, %v389
    %v391 = vpop.f32.mrb[0].mxu0
    %392 = vmatprep.mubr.f32.mxu0 0.0
    %393 = vmatmul.mubr.f32.gmra.mrb[0].mxu0 %v308
    %v394 = vpop.f32.mrb[0].mxu0
    %v395 = vadd.f32 0.0, %v394
    %v396 = vpop.f32.mrb[0].mxu0
    %397 = vmatprep.mubr.f32.mxu0 0.0
    %398 = vmatmul.mubr.f32.gmra.mrb[0].mxu0 %v309
    %v399 = vpop.f32.mrb[0].mxu0
    %v400 = vadd.f32 0.0, %v399
    %v401 = vpop.f32.mrb[0].mxu0
    %402 = vmatprep.mubr.f32.mxu0 0.0
    %403 = vmatmul.mubr.f32.gmra.mrb[0].mxu0 %v310
    %v404 = vpop.f32.mrb[0].mxu0
    %v405 = vadd.f32 0.0, %v404
    %v406 = vpop.f32.mrb[0].mxu0
    %407 = vmatprep.mubr.f32.mxu0 0.0
    %408 = vmatmul.mubr.f32.gmra.mrb[0].mxu0 %v311
    %v409 = vpop.f32.mrb[0].mxu0
    %v410 = vadd.f32 0.0, %v409
    %v411 = vpop.f32.mrb[0].mxu0
    %412 = vmatprep.mubr.f32.mxu0 0.0
    %413 = vmatmul.mubr.f32.gmra.mrb[0].mxu0 %v312
    %v414 = vpop.f32.mrb[0].mxu0
    %v415 = vadd.f32 0.0, %v414
    %v416 = vpop.f32.mrb[0].mxu0
    %417 = vmatprep.mubr.f32.mxu0 0.0
    %418 = vmatmul.mubr.f32.gmra.mrb[0].mxu0 %v313
    %v419 = vpop.f32.mrb[0].mxu0
    %v420 = vadd.f32 0.0, %v419
    %v421 = vpop.f32.mrb[0].mxu0
    %422 = vmatprep.mubr.f32.mxu0 0.0
    %423 = vmatmul.mubr.f32.gmra.mrb[0].mxu0 %v314
    %v424 = vpop.f32.mrb[0].mxu0
    %v425 = vadd.f32 0.0, %v424
    %v426 = vpop.f32.mrb[0].mxu0
    %427 = vmatprep.mubr.f32.mxu0 0.0
    %428 = vmatmul.mubr.f32.gmra.mrb[0].mxu0 %v315
    %v429 = vpop.f32.mrb[0].mxu0
    %v430 = vadd.f32 0.0, %v429
    %v431 = vpop.f32.mrb[0].mxu0
    %432 = vmatprep.mubr.f32.mxu0 0.0
    %433 = vmatmul.mubr.f32.gmra.mrb[0].mxu0 %v316
    %v434 = vpop.f32.mrb[0].mxu0
    %v435 = vadd.f32 0.0, %v434
    %v436 = vpop.f32.mrb[0].mxu0
    %437 = vmatprep.mubr.f32.mxu0 0.0
    %438 = vmatmul.mubr.f32.gmra.mrb[0].mxu0 %v317
    %v439 = vpop.f32.mrb[0].mxu0
    %v440 = vadd.f32 0.0, %v439
    %v441 = vpop.f32.mrb[0].mxu0
    %442 = vmatprep.mubr.f32.mxu0 0.0
    %443 = vmatmul.mubr.f32.gmra.mrb[0].mxu0 %v318
    %v444 = vpop.f32.mrb[0].mxu0
    %v445 = vadd.f32 0.0, %v444
    %v446 = vpop.f32.mrb[0].mxu0
    %447 = vmatprep.mubr.f32.mxu0 0.0
    %448 = vmatmul.mubr.f32.gmra.mrb[0].mxu0 %v319
    %v449 = vpop.f32.mrb[0].mxu0
    %v450 = vadd.f32 0.0, %v449
    %v451 = vpop.f32.mrb[0].mxu0
    %452 = vmatprep.mubr.f32.mxu0 0.0
    %453 = vmatmul.mubr.f32.gmra.mrb[0].mxu0 %v320
    %v454 = vpop.f32.mrb[0].mxu0
    %v455 = vadd.f32 0.0, %v454
    %v456 = vpop.f32.mrb[0].mxu0
    %457 = vmatprep.mubr.f32.mxu0 0.0
    %458 = vmatmul.mubr.f32.gmra.mrb[0].mxu0 %v321
    %v459 = vpop.f32.mrb[0].mxu0
    %v460 = vadd.f32 0.0, %v459
    %v461 = vpop.f32.mrb[0].mxu0
    %462 = vmatprep.mubr.f32.mxu0 0.0
    %463 = vmatmul.mubr.f32.gmra.mrb[0].mxu0 %v322
    %v464 = vpop.f32.mrb[0].mxu0
    %v465 = vadd.f32 0.0, %v464
    %v466 = vpop.f32.mrb[0].mxu0
    %467 = vdwg.mxu0
    %468 = vmatprep.subr.mxu0 0.0
    %469 = vmatpush1.msra.mxu0 %v181
    %470 = vmatprep.subr.mxu0 0.0
    %471 = vmatpush1.msra.mxu0 %v187
    %472 = vmatprep.subr.mxu0 0.0
    %473 = vmatpush1.msra.mxu0 %v193
    %474 = vmatprep.subr.mxu0 0.0
    %475 = vmatpush1.msra.mxu0 %v199
    %476 = vmatprep.subr.mxu0 0.0
    %477 = vmatpush1.msra.mxu0 %v205
    %478 = vmatprep.subr.mxu0 0.0
    %479 = vmatpush1.msra.mxu0 %v211
    %480 = vmatprep.subr.mxu0 0.0
    %481 = vmatpush1.msra.mxu0 %v217
    %482 = vmatprep.subr.mxu0 0.0
    %483 = vmatpush1.msra.mxu0 %v223
    %484 = vmatprep.subr.mxu0 0.0
    %485 = vmatpush1.msra.mxu0 %v229
    %486 = vmatprep.subr.mxu0 0.0
    %487 = vmatpush1.msra.mxu0 %v235
    %488 = vmatprep.subr.mxu0 0.0
    %489 = vmatpush1.msra.mxu0 %v241
    %490 = vmatprep.subr.mxu0 0.0
    %491 = vmatpush1.msra.mxu0 %v247
    %492 = vmatprep.subr.mxu0 0.0
    %493 = vmatpush1.msra.mxu0 %v253
    %494 = vmatprep.subr.mxu0 0.0
    %495 = vmatpush1.msra.mxu0 %v259
    %496 = vmatprep.subr.mxu0 0.0
    %497 = vmatpush1.msra.mxu0 %v265
    %498 = vmatprep.subr.mxu0 0.0
    %499 = vmatpush1.msra.mxu0 %v271
    %500 = vmatprep.subr.mxu0 0.0
    %501 = vmatpush1.msra.mxu0 0.0
    %502 = vmatprep.subr.mxu0 0.0
    %503 = vmatpush1.msra.mxu0 0.0
    %504 = vmatprep.subr.mxu0 0.0
    %505 = vmatpush1.msra.mxu0 0.0
    %506 = vmatprep.subr.mxu0 0.0
    %507 = vmatpush1.msra.mxu0 0.0
    %508 = vmatprep.subr.mxu0 0.0
    %509 = vmatpush1.msra.mxu0 0.0
    %510 = vmatprep.subr.mxu0 0.0
    %511 = vmatpush1.msra.mxu0 0.0
    %512 = vmatprep.subr.mxu0 0.0
    %513 = vmatpush1.msra.mxu0 0.0
    %514 = vmatprep.subr.mxu0 0.0
    %515 = vmatpush1.msra.mxu0 0.0
    %516 = vmatprep.subr.mxu0 0.0
    %517 = vmatpush1.msra.mxu0 0.0
    %518 = vmatprep.subr.mxu0 0.0
    %519 = vmatpush1.msra.mxu0 0.0
    %520 = vmatprep.subr.mxu0 0.0
    %521 = vmatpush1.msra.mxu0 0.0
    %522 = vmatprep.subr.mxu0 0.0
    %523 = vmatpush1.msra.mxu0 0.0
    %524 = vmatprep.subr.mxu0 0.0
    %525 = vmatpush1.msra.mxu0 0.0
    %526 = vmatprep.subr.mxu0 0.0
    %527 = vmatpush1.msra.mxu0 0.0
    %528 = vmatprep.subr.mxu0 0.0
    %529 = vmatpush1.msra.mxu0 0.0
    %530 = vmatprep.subr.mxu0 0.0
    %531 = vmatpush1.msra.mxu0 0.0
    %532 = vmatprep.mubr.f32.mxu0 0.0
    %533 = vmatmul.mubr.f32.gmra.mrb[0].mxu0 %v291
    %v534 = vpop.f32.mrb[0].mxu0
    %v535 = vadd.f32 %v390, %v534
    %v536 = vpop.f32.mrb[0].mxu0
    %537 = vmatprep.mubr.f32.mxu0 0.0
    %538 = vmatmul.mubr.f32.gmra.mrb[0].mxu0 %v292
    %v539 = vpop.f32.mrb[0].mxu0
    %v540 = vadd.f32 %v395, %v539
    %v541 = vpop.f32.mrb[0].mxu0
    %542 = vmatprep.mubr.f32.mxu0 0.0
    %543 = vmatmul.mubr.f32.gmra.mrb[0].mxu0 %v293
    %v544 = vpop.f32.mrb[0].mxu0
    %v545 = vadd.f32 %v400, %v544
    %v546 = vpop.f32.mrb[0].mxu0
    %547 = vmatprep.mubr.f32.mxu0 0.0
    %548 = vmatmul.mubr.f32.gmra.mrb[0].mxu0 %v294
    %v549 = vpop.f32.mrb[0].mxu0
    %v550 = vadd.f32 %v405, %v549
    %v551 = vpop.f32.mrb[0].mxu0
    %552 = vmatprep.mubr.f32.mxu0 0.0
    %553 = vmatmul.mubr.f32.gmra.mrb[0].mxu0 %v295
    %v554 = vpop.f32.mrb[0].mxu0
    %v555 = vadd.f32 %v410, %v554
    %v556 = vpop.f32.mrb[0].mxu0
    %557 = vmatprep.mubr.f32.mxu0 0.0
    %558 = vmatmul.mubr.f32.gmra.mrb[0].mxu0 %v296
    %v559 = vpop.f32.mrb[0].mxu0
    %v560 = vadd.f32 %v415, %v559
    %v561 = vpop.f32.mrb[0].mxu0
    %562 = vmatprep.mubr.f32.mxu0 0.0
    %563 = vmatmul.mubr.f32.gmra.mrb[0].mxu0 %v297
    %v564 = vpop.f32.mrb[0].mxu0
    %v565 = vadd.f32 %v420, %v564
    %v566 = vpop.f32.mrb[0].mxu0
    %567 = vmatprep.mubr.f32.mxu0 0.0
    %568 = vmatmul.mubr.f32.gmra.mrb[0].mxu0 %v298
    %v569 = vpop.f32.mrb[0].mxu0
    %v570 = vadd.f32 %v425, %v569
    %v571 = vpop.f32.mrb[0].mxu0
    %572 = vmatprep.mubr.f32.mxu0 0.0
    %573 = vmatmul.mubr.f32.gmra.mrb[0].mxu0 %v299
    %v574 = vpop.f32.mrb[0].mxu0
    %v575 = vadd.f32 %v430, %v574
    %v576 = vpop.f32.mrb[0].mxu0
    %577 = vmatprep.mubr.f32.mxu0 0.0
    %578 = vmatmul.mubr.f32.gmra.mrb[0].mxu0 %v300
    %v579 = vpop.f32.mrb[0].mxu0
    %v580 = vadd.f32 %v435, %v579
    %v581 = vpop.f32.mrb[0].mxu0
    %582 = vmatprep.mubr.f32.mxu0 0.0
    %583 = vmatmul.mubr.f32.gmra.mrb[0].mxu0 %v301
    %v584 = vpop.f32.mrb[0].mxu0
    %v585 = vadd.f32 %v440, %v584
    %v586 = vpop.f32.mrb[0].mxu0
    %587 = vmatprep.mubr.f32.mxu0 0.0
    %588 = vmatmul.mubr.f32.gmra.mrb[0].mxu0 %v302
    %v589 = vpop.f32.mrb[0].mxu0
    %v590 = vadd.f32 %v445, %v589
    %v591 = vpop.f32.mrb[0].mxu0
    %592 = vmatprep.mubr.f32.mxu0 0.0
    %593 = vmatmul.mubr.f32.gmra.mrb[0].mxu0 %v303
    %v594 = vpop.f32.mrb[0].mxu0
    %v595 = vadd.f32 %v450, %v594
    %v596 = vpop.f32.mrb[0].mxu0
    %597 = vmatprep.mubr.f32.mxu0 0.0
    %598 = vmatmul.mubr.f32.gmra.mrb[0].mxu0 %v304
    %v599 = vpop.f32.mrb[0].mxu0
    %v600 = vadd.f32 %v455, %v599
    %v601 = vpop.f32.mrb[0].mxu0
    %602 = vmatprep.mubr.f32.mxu0 0.0
    %603 = vmatmul.mubr.f32.gmra.mrb[0].mxu0 %v305
    %v604 = vpop.f32.mrb[0].mxu0
    %v605 = vadd.f32 %v460, %v604
    %v606 = vpop.f32.mrb[0].mxu0
    %607 = vmatprep.mubr.f32.mxu0 0.0
    %608 = vmatmul.mubr.f32.gmra.mrb[0].mxu0 %v306
    %v609 = vpop.f32.mrb[0].mxu0
    %v610 = vadd.f32 %v465, %v609
    %v611 = vpop.f32.mrb[0].mxu0
    %612 = vdwg.mxu0
    %v613 = vadd.f32 %v275, %v535
    %v614 = vadd.f32 %v276, %v540
    %v615 = vadd.f32 %v277, %v545
    %v616 = vadd.f32 %v278, %v550
    %v617 = vadd.f32 %v279, %v555
    %v618 = vadd.f32 %v280, %v560
    %v619 = vadd.f32 %v281, %v565
    %v620 = vadd.f32 %v282, %v570
    %v621 = vadd.f32 %v283, %v575
    %v622 = vadd.f32 %v284, %v580
    %v623 = vadd.f32 %v285, %v585
    %v624 = vadd.f32 %v286, %v590
    %v625 = vadd.f32 %v287, %v595
    %v626 = vadd.f32 %v288, %v600
    %v627 = vadd.f32 %v289, %v605
    %v628 = vadd.f32 %v290, %v610
    %629 = vst [vmem:[#allocation2] sm:$0xff] %v613
    %630 = vst [vmem:[#allocation2 + $0x8] sm:$0xff] %v614
    %631 = vst [vmem:[#allocation2 + $0x10] sm:$0xff] %v615
    %632 = vst [vmem:[#allocation2 + $0x18] sm:$0xff] %v616
    %633 = vst [vmem:[#allocation2 + $0x20] sm:$0xff] %v617
    %634 = vst [vmem:[#allocation2 + $0x28] sm:$0xff] %v618
    %635 = vst [vmem:[#allocation2 + $0x30] sm:$0xff] %v619
    %636 = vst [vmem:[#allocation2 + $0x38] sm:$0xff] %v620
    %637 = vst [vmem:[#allocation2 + $0x40] sm:$0xff] %v621
    %638 = vst [vmem:[#allocation2 + $0x48] sm:$0xff] %v622
    %639 = vst [vmem:[#allocation2 + $0x50] sm:$0xff] %v623
    %640 = vst [vmem:[#allocation2 + $0x58] sm:$0xff] %v624
    %641 = vst [vmem:[#allocation2 + $0x60] sm:$0xff] %v625
    %642 = vst [vmem:[#allocation2 + $0x68] sm:$0xff] %v626
    %643 = vst [vmem:[#allocation2 + $0x70] sm:$0xff] %v627
    %644 = vst [vmem:[#allocation2 + $0x78] sm:$0xff] %v628
    // Predicated region
    $region34: #{tpu_custom_call.1} parent=1 // pred_check
      %p645 = pneg %p27
    $region35: #{tpu_custom_call.1} parent=1 // pred_check_branch
      %647 = sbr.rel (%p645) target = $region37
    $region36: #{tpu_custom_call.1} parent=1 // pred_region
      %v648 = vld [vmem:[%s3] sm:$0xff]
      %v649 = vld [vmem:[%s3 + $0x8] sm:$0xff]
      %v650 = vld [vmem:[%s3 + $0x10] sm:$0xff]
      %v651 = vld [vmem:[%s3 + $0x18] sm:$0xff]
      %v652 = vld [vmem:[%s3 + $0x20] sm:$0xff]
      %v653 = vld [vmem:[%s3 + $0x28] sm:$0xff]
      %v654 = vld [vmem:[%s3 + $0x30] sm:$0xff]
      %v655 = vld [vmem:[%s3 + $0x38] sm:$0xff]
      %v656 = vld [vmem:[%s3 + $0x40] sm:$0xff]
      %v657 = vld [vmem:[%s3 + $0x48] sm:$0xff]
      %v658 = vld [vmem:[%s3 + $0x50] sm:$0xff]
      %v659 = vld [vmem:[%s3 + $0x58] sm:$0xff]
      %v660 = vld [vmem:[%s3 + $0x60] sm:$0xff]
      %v661 = vld [vmem:[%s3 + $0x68] sm:$0xff]
      %v662 = vld [vmem:[%s3 + $0x70] sm:$0xff]
      %v663 = vld [vmem:[%s3 + $0x78] sm:$0xff]
      %v664 = vld [vmem:[%s5] sm:$0xff]
      %v666 = vsel %vm65, %v648, 0
      %v669 = vsel %vm65, %v649, 0
      %v672 = vsel %vm65, %v650, 0
      %v675 = vsel %vm65, %v651, 0
      %v678 = vsel %vm65, %v652, 0
      %v681 = vsel %vm65, %v653, 0
      %v684 = vsel %vm65, %v654, 0
      %v687 = vsel %vm65, %v655, 0
      %v690 = vsel %vm65, %v656, 0
      %v693 = vsel %vm65, %v657, 0
      %v696 = vsel %vm65, %v658, 0
      %v699 = vsel %vm65, %v659, 0
      %v702 = vsel %vm65, %v660, 0
      %v705 = vsel %vm65, %v661, 0
      %v708 = vsel %vm65, %v662, 0
      %v711 = vsel %vm65, %v663, 0
      %713 = vmatprep.subr.mxu0 0.0
      %714 = vmatpush1.msra.mxu0 %v664
      %715 = vmatprep.subr.mxu0 0.0
      %716 = vmatpush1.msra.mxu0 0.0
      %717 = vmatprep.subr.mxu0 0.0
      %718 = vmatpush1.msra.mxu0 0.0
      %719 = vmatprep.subr.mxu0 0.0
      %720 = vmatpush1.msra.mxu0 0.0
      %721 = vmatprep.subr.mxu0 0.0
      %722 = vmatpush1.msra.mxu0 0.0
      %723 = vmatprep.subr.mxu0 0.0
      %724 = vmatpush1.msra.mxu0 0.0
      %725 = vmatprep.subr.mxu0 0.0
      %726 = vmatpush1.msra.mxu0 0.0
      %727 = vmatprep.subr.mxu0 0.0
      %728 = vmatpush1.msra.mxu0 0.0
      %729 = vmatprep.subr.mxu0 0.0
      %730 = vmatpush1.msra.mxu0 0.0
      %731 = vmatprep.subr.mxu0 0.0
      %732 = vmatpush1.msra.mxu0 0.0
      %733 = vmatprep.subr.mxu0 0.0
      %734 = vmatpush1.msra.mxu0 0.0
      %735 = vmatprep.subr.mxu0 0.0
      %736 = vmatpush1.msra.mxu0 0.0
      %737 = vmatprep.subr.mxu0 0.0
      %738 = vmatpush1.msra.mxu0 0.0
      %739 = vmatprep.subr.mxu0 0.0
      %740 = vmatpush1.msra.mxu0 0.0
      %741 = vmatprep.subr.mxu0 0.0
      %742 = vmatpush1.msra.mxu0 0.0
      %743 = vmatprep.subr.mxu0 0.0
      %744 = vmatpush1.msra.mxu0 0.0
      %745 = vmatprep.subr.mxu0 0.0
      %746 = vmatpush1.msra.mxu0 0.0
      %747 = vmatprep.subr.mxu0 0.0
      %748 = vmatpush1.msra.mxu0 0.0
      %749 = vmatprep.subr.mxu0 0.0
      %750 = vmatpush1.msra.mxu0 0.0
      %751 = vmatprep.subr.mxu0 0.0
      %752 = vmatpush1.msra.mxu0 0.0
      %753 = vmatprep.subr.mxu0 0.0
      %754 = vmatpush1.msra.mxu0 0.0
      %755 = vmatprep.subr.mxu0 0.0
      %756 = vmatpush1.msra.mxu0 0.0
      %757 = vmatprep.subr.mxu0 0.0
      %758 = vmatpush1.msra.mxu0 0.0
      %759 = vmatprep.subr.mxu0 0.0
      %760 = vmatpush1.msra.mxu0 0.0
      %761 = vmatprep.subr.mxu0 0.0
      %762 = vmatpush1.msra.mxu0 0.0
      %763 = vmatprep.subr.mxu0 0.0
      %764 = vmatpush1.msra.mxu0 0.0
      %765 = vmatprep.subr.mxu0 0.0
      %766 = vmatpush1.msra.mxu0 0.0
      %767 = vmatprep.subr.mxu0 0.0
      %768 = vmatpush1.msra.mxu0 0.0
      %769 = vmatprep.subr.mxu0 0.0
      %770 = vmatpush1.msra.mxu0 0.0
      %771 = vmatprep.subr.mxu0 0.0
      %772 = vmatpush1.msra.mxu0 0.0
      %773 = vmatprep.subr.mxu0 0.0
      %774 = vmatpush1.msra.mxu0 0.0
      %775 = vmatprep.subr.mxu0 0.0
      %776 = vmatpush1.msra.mxu0 0.0
      %777 = vmatprep.mubr.f32.mxu0 0.0
      %778 = vmatmul.mubr.f32.gmra.mrb[0].mxu0 %v666
      %v779 = vpop.f32.mrb[0].mxu0
      %v780 = vadd.f32 0.0, %v779
      %v781 = vpop.f32.mrb[0].mxu0
      %782 = vmatprep.mubr.f32.mxu0 0.0
      %783 = vmatmul.mubr.f32.gmra.mrb[0].mxu0 %v669
      %v784 = vpop.f32.mrb[0].mxu0
      %v785 = vadd.f32 0.0, %v784
      %v786 = vpop.f32.mrb[0].mxu0
      %787 = vmatprep.mubr.f32.mxu0 0.0
      %788 = vmatmul.mubr.f32.gmra.mrb[0].mxu0 %v672
      %v789 = vpop.f32.mrb[0].mxu0
      %v790 = vadd.f32 0.0, %v789
      %v791 = vpop.f32.mrb[0].mxu0
      %792 = vmatprep.mubr.f32.mxu0 0.0
      %793 = vmatmul.mubr.f32.gmra.mrb[0].mxu0 %v675
      %v794 = vpop.f32.mrb[0].mxu0
      %v795 = vadd.f32 0.0, %v794
      %v796 = vpop.f32.mrb[0].mxu0
      %797 = vmatprep.mubr.f32.mxu0 0.0
      %798 = vmatmul.mubr.f32.gmra.mrb[0].mxu0 %v678
      %v799 = vpop.f32.mrb[0].mxu0
      %v800 = vadd.f32 0.0, %v799
      %v801 = vpop.f32.mrb[0].mxu0
      %802 = vmatprep.mubr.f32.mxu0 0.0
      %803 = vmatmul.mubr.f32.gmra.mrb[0].mxu0 %v681
      %v804 = vpop.f32.mrb[0].mxu0
      %v805 = vadd.f32 0.0, %v804
      %v806 = vpop.f32.mrb[0].mxu0
      %807 = vmatprep.mubr.f32.mxu0 0.0
      %808 = vmatmul.mubr.f32.gmra.mrb[0].mxu0 %v684
      %v809 = vpop.f32.mrb[0].mxu0
      %v810 = vadd.f32 0.0, %v809
      %v811 = vpop.f32.mrb[0].mxu0
      %812 = vmatprep.mubr.f32.mxu0 0.0
      %813 = vmatmul.mubr.f32.gmra.mrb[0].mxu0 %v687
      %v814 = vpop.f32.mrb[0].mxu0
      %v815 = vadd.f32 0.0, %v814
      %v816 = vpop.f32.mrb[0].mxu0
      %817 = vmatprep.mubr.f32.mxu0 0.0
      %818 = vmatmul.mubr.f32.gmra.mrb[0].mxu0 %v690
      %v819 = vpop.f32.mrb[0].mxu0
      %v820 = vadd.f32 0.0, %v819
      %v821 = vpop.f32.mrb[0].mxu0
      %822 = vmatprep.mubr.f32.mxu0 0.0
      %823 = vmatmul.mubr.f32.gmra.mrb[0].mxu0 %v693
      %v824 = vpop.f32.mrb[0].mxu0
      %v825 = vadd.f32 0.0, %v824
      %v826 = vpop.f32.mrb[0].mxu0
      %827 = vmatprep.mubr.f32.mxu0 0.0
      %828 = vmatmul.mubr.f32.gmra.mrb[0].mxu0 %v696
      %v829 = vpop.f32.mrb[0].mxu0
      %v830 = vadd.f32 0.0, %v829
      %v831 = vpop.f32.mrb[0].mxu0
      %832 = vmatprep.mubr.f32.mxu0 0.0
      %833 = vmatmul.mubr.f32.gmra.mrb[0].mxu0 %v699
      %v834 = vpop.f32.mrb[0].mxu0
      %v835 = vadd.f32 0.0, %v834
      %v836 = vpop.f32.mrb[0].mxu0
      %837 = vmatprep.mubr.f32.mxu0 0.0
      %838 = vmatmul.mubr.f32.gmra.mrb[0].mxu0 %v702
      %v839 = vpop.f32.mrb[0].mxu0
      %v840 = vadd.f32 0.0, %v839
      %v841 = vpop.f32.mrb[0].mxu0
      %842 = vmatprep.mubr.f32.mxu0 0.0
      %843 = vmatmul.mubr.f32.gmra.mrb[0].mxu0 %v705
      %v844 = vpop.f32.mrb[0].mxu0
      %v845 = vadd.f32 0.0, %v844
      %v846 = vpop.f32.mrb[0].mxu0
      %847 = vmatprep.mubr.f32.mxu0 0.0
      %848 = vmatmul.mubr.f32.gmra.mrb[0].mxu0 %v708
      %v849 = vpop.f32.mrb[0].mxu0
      %v850 = vadd.f32 0.0, %v849
      %v851 = vpop.f32.mrb[0].mxu0
      %852 = vmatprep.mubr.f32.mxu0 0.0
      %853 = vmatmul.mubr.f32.gmra.mrb[0].mxu0 %v711
      %v854 = vpop.f32.mrb[0].mxu0
      %v855 = vadd.f32 0.0, %v854
      %v856 = vpop.f32.mrb[0].mxu0
      %857 = vdwg.mxu0
      %v858 = vld [vmem:[#allocation2] sm:$0xff]
      %v859 = vld [vmem:[#allocation2 + $0x8] sm:$0xff]
      %v860 = vld [vmem:[#allocation2 + $0x10] sm:$0xff]
      %v861 = vld [vmem:[#allocation2 + $0x18] sm:$0xff]
      %v862 = vld [vmem:[#allocation2 + $0x20] sm:$0xff]
      %v863 = vld [vmem:[#allocation2 + $0x28] sm:$0xff]
      %v864 = vld [vmem:[#allocation2 + $0x30] sm:$0xff]
      %v865 = vld [vmem:[#allocation2 + $0x38] sm:$0xff]
      %v866 = vld [vmem:[#allocation2 + $0x40] sm:$0xff]
      %v867 = vld [vmem:[#allocation2 + $0x48] sm:$0xff]
      %v868 = vld [vmem:[#allocation2 + $0x50] sm:$0xff]
      %v869 = vld [vmem:[#allocation2 + $0x58] sm:$0xff]
      %v870 = vld [vmem:[#allocation2 + $0x60] sm:$0xff]
      %v871 = vld [vmem:[#allocation2 + $0x68] sm:$0xff]
      %v872 = vld [vmem:[#allocation2 + $0x70] sm:$0xff]
      %v873 = vld [vmem:[#allocation2 + $0x78] sm:$0xff]
      %v874 = vadd.f32 %v858, %v780
      %v875 = vadd.f32 %v859, %v785
      %v876 = vadd.f32 %v860, %v790
      %v877 = vadd.f32 %v861, %v795
      %v878 = vadd.f32 %v862, %v800
      %v879 = vadd.f32 %v863, %v805
      %v880 = vadd.f32 %v864, %v810
      %v881 = vadd.f32 %v865, %v815
      %v882 = vadd.f32 %v866, %v820
      %v883 = vadd.f32 %v867, %v825
      %v884 = vadd.f32 %v868, %v830
      %v885 = vadd.f32 %v869, %v835
      %v886 = vadd.f32 %v870, %v840
      %v887 = vadd.f32 %v871, %v845
      %v888 = vadd.f32 %v872, %v850
      %v889 = vadd.f32 %v873, %v855
      %v890 = vld [vmem:[%s6] sm:$0x1]
      %v892 = vlaneseq
      %v893 = vshrl.u32 %v892, 7
      %v894 = vsub.s32 0, %v893
      %v895 = vrot.slane %v890, %v894
      %v897 = vadd.f32 %v874, %v895
      %v898 = vadd.f32 %v875, %v895
      %v899 = vadd.f32 %v876, %v895
      %v900 = vadd.f32 %v877, %v895
      %v901 = vadd.f32 %v878, %v895
      %v902 = vadd.f32 %v879, %v895
      %v903 = vadd.f32 %v880, %v895
      %v904 = vadd.f32 %v881, %v895
      %v905 = vadd.f32 %v882, %v895
      %v906 = vadd.f32 %v883, %v895
      %v907 = vadd.f32 %v884, %v895
      %v908 = vadd.f32 %v885, %v895
      %v909 = vadd.f32 %v886, %v895
      %v910 = vadd.f32 %v887, %v895
      %v911 = vadd.f32 %v888, %v895
      %v912 = vadd.f32 %v889, %v895
      %913 = vst [vmem:[#allocation3] sm:$0xff] %v897
      %914 = vst [vmem:[#allocation3 + $0x8] sm:$0xff] %v898
      %915 = vst [vmem:[#allocation3 + $0x10] sm:$0xff] %v899
      %916 = vst [vmem:[#allocation3 + $0x18] sm:$0xff] %v900
      %917 = vst [vmem:[#allocation3 + $0x20] sm:$0xff] %v901
      %918 = vst [vmem:[#allocation3 + $0x28] sm:$0xff] %v902
      %919 = vst [vmem:[#allocation3 + $0x30] sm:$0xff] %v903
      %920 = vst [vmem:[#allocation3 + $0x38] sm:$0xff] %v904
      %921 = vst [vmem:[#allocation3 + $0x40] sm:$0xff] %v905
      %922 = vst [vmem:[#allocation3 + $0x48] sm:$0xff] %v906
      %923 = vst [vmem:[#allocation3 + $0x50] sm:$0xff] %v907
      %924 = vst [vmem:[#allocation3 + $0x58] sm:$0xff] %v908
      %925 = vst [vmem:[#allocation3 + $0x60] sm:$0xff] %v909
      %926 = vst [vmem:[#allocation3 + $0x68] sm:$0xff] %v910
      %927 = vst [vmem:[#allocation3 + $0x70] sm:$0xff] %v911
      %928 = vst [vmem:[#allocation3 + $0x78] sm:$0xff] %v912
    $region37: #{tpu_custom_call.1} parent=1 // pred_fallthru
      _
    // Predicated region
    $region38: #{tpu_custom_call.1} parent=1 // pred_check
      _
    $region39: #{tpu_custom_call.1} parent=1 // pred_check_branch
      %930 = sbr.rel (0) target = $region41
    $region40: #{tpu_custom_call.1} parent=1 // pred_region
      %s932 = ssub.s32 2048, 2048
      %933 = vsyncadd [#allocation4], %s932
      %s934 = sshll.u32 [#allocation3], 4
      %s935 = int_to_ptr.vmem [resolvable:$true] %s934
      %940 = dma.vmem_to_hbm [thread:$0]  %s935, 2048, %s7, [#allocation4], 128, 128, 8
    $region41: #{tpu_custom_call.1} parent=1 // pred_fallthru
      _
    // Predicated region
    $region42: #{tpu_custom_call.1} parent=1 // pred_check
      _
    $region43: #{tpu_custom_call.1} parent=1 // pred_check_branch
      %942 = sbr.rel (0) target = $region45
    $region44: #{tpu_custom_call.1} parent=1 // pred_region
      %943 = dma.done [#allocation4], 2048
    $region45: #{tpu_custom_call.1} parent=1 // pred_fallthru
      _
    %944 = vsyncpa [#allocation4], 1

</llo_original>
